<compile_context>
chip_gen: v6e
topology: v6e:2x2x1
jax: 0.10.0
libtpu: 0.0.40
codegen_flags: <defaults>
</compile_context>

<pallas_src>
import functools
import operator

import jax
import jax.numpy as jnp
from jax.experimental import pallas as pl
from jax.experimental.pallas import tpu as pltpu


def actnorm_fwd_kernel(x_ref, mask_ref, log_scale_ref, bias_ref, out_ref):
    """out = (x * exp(log_scale) + bias) * mask, one (row_tile, F) block."""
    scale = jnp.exp(log_scale_ref[...])                       # (1, F), EUP
    out = x_ref[...] * scale + bias_ref[...]                  # broadcast over rows
    out_ref[...] = (out * mask_ref[...]).astype(out_ref.dtype)


def actnorm_inv_kernel(x_ref, mask_ref, log_scale_ref, bias_ref, out_ref):
    """out = ((x - bias) * mask) / (exp(log_scale) + 1e-8), one block."""
    denom = jnp.exp(log_scale_ref[...]) + 1e-8                # (1, F)
    out = (x_ref[...] - bias_ref[...]) * mask_ref[...]
    out_ref[...] = (out / denom).astype(out_ref.dtype)


def actnorm_flow(x, mask, log_scale, bias, *, fwd=True, row_tile=512):
    """ActNormFlow.forward(input, mask, fwd).

    x:    [batch, N1, ..., Nl, in_features]
    mask: [batch, N1, ..., Nl]
    log_scale, bias: [in_features]
    """
    *lead, F = x.shape
    rows = functools.reduce(operator.mul, lead, 1)

    xf = x.reshape(rows, F)
    maskf = mask.reshape(rows, 1).astype(x.dtype)
    ls = log_scale.reshape(1, F).astype(jnp.float32)
    b = bias.reshape(1, F).astype(jnp.float32)

    # Pick a large row tile; for tiny inputs use the whole row range rounded
    # up to a sublane multiple (8). Pad rows so the grid divides evenly.
    rt = row_tile
    if rows < rt:
        rt = ((rows + 7) // 8) * 8
    pad = (-rows) % rt
    if pad:
        xf = jnp.pad(xf, ((0, pad), (0, 0)))
        maskf = jnp.pad(maskf, ((0, pad), (0, 0)))
    total = rows + pad

    kernel = actnorm_fwd_kernel if fwd else actnorm_inv_kernel

    out = pl.pallas_call(
        kernel,
        out_shape=jax.ShapeDtypeStruct((total, F), x.dtype),
        grid_spec=pltpu.PrefetchScalarGridSpec(
            num_scalar_prefetch=0,
            grid=(total // rt,),
            in_specs=[
                pl.BlockSpec((rt, F), lambda i: (i, 0)),   # x rows
                pl.BlockSpec((rt, 1), lambda i: (i, 0)),   # mask rows
                pl.BlockSpec((1, F), lambda i: (0, 0)),    # log_scale (constant)
                pl.BlockSpec((1, F), lambda i: (0, 0)),    # bias (constant)
            ],
            out_specs=pl.BlockSpec((rt, F), lambda i: (i, 0)),
        ),
        compiler_params=pltpu.CompilerParams(
            dimension_semantics=("parallel",)),
    )(xf, maskf, ls, b)

    if pad:
        out = out[:rows]
    return out.reshape(x.shape)


def reference_forward(x, mask, log_scale, bias, fwd=True):
    """Pure-JAX reference mirroring the PyTorch semantics."""
    m = mask[..., None].astype(x.dtype)
    if fwd:
        return (x * jnp.exp(log_scale) + bias) * m
    return ((x - bias) * m) / (jnp.exp(log_scale) + 1e-8)


if __name__ == "__main__":
    key = jax.random.PRNGKey(0)
    k_x, k_ls, k_b = jax.random.split(key, 3)

    # Small shapes consistent with the module: [batch, seq, in_features], mask [batch, seq].
    B, T, Fdim = 2, 16, 32

    x = jax.random.normal(k_x, (B, T, Fdim), dtype=jnp.float32)
    # Padding-style mask: batch 1 has its last 4 timesteps masked out.
    lengths = jnp.array([T, T - 4], dtype=jnp.int32)
    mask = (jnp.arange(T)[None, :] < lengths[:, None]).astype(jnp.float32)

    # Parameters: log_scale ~ N(0, 0.05) as in reset_parameters; use a nonzero
    # bias so the bias path is actually exercised by the test.
    log_scale = 0.05 * jax.random.normal(k_ls, (Fdim,), dtype=jnp.float32)
    bias = 0.1 * jax.random.normal(k_b, (Fdim,), dtype=jnp.float32)

    out_fwd = actnorm_flow(x, mask, log_scale, bias, fwd=True)
    out_fwd = jax.block_until_ready(out_fwd)
    ref_fwd = reference_forward(x, mask, log_scale, bias, fwd=True)
    assert out_fwd.shape == (B, T, Fdim)
    assert jnp.allclose(out_fwd, ref_fwd, atol=1e-5, rtol=1e-5), "fwd mismatch"

    out_inv = actnorm_flow(x, mask, log_scale, bias, fwd=False)
    out_inv = jax.block_until_ready(out_inv)
    ref_inv = reference_forward(x, mask, log_scale, bias, fwd=False)
    assert jnp.allclose(out_inv, ref_inv, atol=1e-5, rtol=1e-5), "inv mismatch"

    # TODO(synk): the docstring of ActNormFlow.forward mentions a logdet return,
    # but the PyTorch fwd/inv branches shown only return `out`, so no logdet is
    # computed here either.
    print("KERNEL_OK")
</pallas_src>

<mosaic_0001>
module attributes {stable_mosaic.version = 11 : i64} {
  func.func @actnorm_fwd_kernel(%arg0: i32, %arg1: memref<32x32xf32, #tpu.memory_space<vmem>>, %arg2: memref<32x1xf32, #tpu.memory_space<vmem>>, %arg3: memref<1x32xf32, #tpu.memory_space<vmem>>, %arg4: memref<1x32xf32, #tpu.memory_space<vmem>>, %arg5: memref<32x32xf32, #tpu.memory_space<vmem>>) attributes {dimension_semantics = [#tpu.dimension_semantics<parallel>], iteration_bounds = array<i64: 1>, scalar_prefetch = 0 : i64, scratch_operands = 0 : i64, tpu.core_type = #tpu.core_type<tc>, window_params = [{transform_indices = @transform_0, window_bounds = array<i64: 32, 32>}, {transform_indices = @transform_1, window_bounds = array<i64: 32, 1>}, {pipeline_mode = #tpu.pipeline_mode<synchronous>, transform_indices = @transform_2, window_bounds = array<i64: 1, 32>}, {pipeline_mode = #tpu.pipeline_mode<synchronous>, transform_indices = @transform_3, window_bounds = array<i64: 1, 32>}, {transform_indices = @transform_4, window_bounds = array<i64: 32, 32>}]} {
    %c0 = arith.constant 0 : index
    %c0_0 = arith.constant 0 : index
    %0 = vector.load %arg3[%c0, %c0_0] : memref<1x32xf32, #tpu.memory_space<vmem>>, vector<1x32xf32>
    %1 = math.exp %0 : vector<1x32xf32>
    %c0_1 = arith.constant 0 : index
    %c0_2 = arith.constant 0 : index
    %2 = vector.load %arg1[%c0_1, %c0_2] : memref<32x32xf32, #tpu.memory_space<vmem>>, vector<32x32xf32>
    %3 = vector.broadcast %1 : vector<1x32xf32> to vector<32x32xf32>
    %4 = arith.mulf %2, %3 : vector<32x32xf32>
    %c0_3 = arith.constant 0 : index
    %c0_4 = arith.constant 0 : index
    %5 = vector.load %arg4[%c0_3, %c0_4] : memref<1x32xf32, #tpu.memory_space<vmem>>, vector<1x32xf32>
    %6 = vector.broadcast %5 : vector<1x32xf32> to vector<32x32xf32>
    %7 = arith.addf %4, %6 : vector<32x32xf32>
    %c0_5 = arith.constant 0 : index
    %c0_6 = arith.constant 0 : index
    %8 = vector.load %arg2[%c0_5, %c0_6] : memref<32x1xf32, #tpu.memory_space<vmem>>, vector<32x1xf32>
    %9 = vector.broadcast %8 : vector<32x1xf32> to vector<32x32xf32>
    %10 = arith.mulf %7, %9 : vector<32x32xf32>
    %c0_7 = arith.constant 0 : index
    %c0_8 = arith.constant 0 : index
    %11 = vector.load %arg5[%c0_7, %c0_8] : memref<32x32xf32, #tpu.memory_space<vmem>>, vector<32x32xf32>
    tpu.vector_store %arg5[%c0_7, %c0_8], %10 {strides = array<i32>} : memref<32x32xf32, #tpu.memory_space<vmem>>, vector<32x32xf32>,
    return
  }
  func.func @transform_0(%arg0: i32) -> (i32, i32) {
    %c0_i32 = arith.constant 0 : i32
    %c0_i32_0 = arith.constant 0 : i32
    return %arg0, %c0_i32 : i32, i32
  }
  func.func @transform_1(%arg0: i32) -> (i32, i32) {
    %c0_i32 = arith.constant 0 : i32
    %c0_i32_0 = arith.constant 0 : i32
    return %arg0, %c0_i32 : i32, i32
  }
  func.func @transform_2(%arg0: i32) -> (i32, i32) {
    %c0_i32 = arith.constant 0 : i32
    %c0_i32_0 = arith.constant 0 : i32
    %c0_i32_1 = arith.constant 0 : i32
    return %c0_i32, %c0_i32_0 : i32, i32
  }
  func.func @transform_3(%arg0: i32) -> (i32, i32) {
    %c0_i32 = arith.constant 0 : i32
    %c0_i32_0 = arith.constant 0 : i32
    %c0_i32_1 = arith.constant 0 : i32
    return %c0_i32, %c0_i32_0 : i32, i32
  }
  func.func @transform_4(%arg0: i32) -> (i32, i32) {
    %c0_i32 = arith.constant 0 : i32
    %c0_i32_0 = arith.constant 0 : i32
    return %arg0, %c0_i32 : i32, i32
  }
}

</mosaic_0001>

<llo_original>
// kernel: tpu_custom_call.1
$region0: #{tpu_custom_call.1}
  #allocation0 [shape = 'u32[]', space=smem, size = 0x4, offset = 0x4, fixed_abs, tag = 'smem constant byte address 0x4 - core index']
  #allocation1 [shape = 'u32[144,128]{1,0:T(1,128)}', space=vmem, size = 0x12000, scoped, tag = 'internal scratch']
  %s0 = inlined_call_operand.vmem [shape: f32[32,32], index: 0, kind: input, shape index: {}]
  %s1 = inlined_call_operand.vmem [shape: f32[32,1], index: 1, kind: input, shape index: {}]
  %s2 = inlined_call_operand.vmem [shape: f32[1,32], index: 2, kind: input, shape index: {}]
  %s3 = inlined_call_operand.vmem [shape: f32[1,32], index: 3, kind: input, shape index: {}]
  %s4 = inlined_call_operand.hbm [shape: f32[32,32], index: 4, kind: output, shape index: {}]
  %s5 = sld [smem:[#allocation0]]
  $region26: #{tpu_custom_call.1} parent=0
    _
  %s7 = ssub.s32 1, %s5
  %s8 = scalar_select 0, %s7, %s5
  $region1: #{tpu_custom_call.1} parent=0
    #allocation2 [shape = 'u8[16384]{0}', space=vmem, size = 0x4000, scoped, tag = 'output window, operand 0, single buffered']
    #allocation3 [shape = 's32[1]{0}', space=sflag, size = 0x4, scoped, tag = 'scoped memory for tpu_custom_call.1']
    %9 = vsyncpa [#allocation3], 0
    // Predicated region
    $region2: #{tpu_custom_call.1} parent=1 // pred_check
      _
    $region3: #{tpu_custom_call.1} parent=1 // pred_check_branch
      %11 = sbr.rel (0) target = $region5
    $region4: #{tpu_custom_call.1} parent=1 // pred_region
      _
    $region5: #{tpu_custom_call.1} parent=1 // pred_fallthru
      _
    // Predicated region
    $region6: #{tpu_custom_call.1} parent=1 // pred_check
      _
    $region7: #{tpu_custom_call.1} parent=1 // pred_check_branch
      %13 = sbr.rel (0) target = $region9
    $region8: #{tpu_custom_call.1} parent=1 // pred_region
      _
    $region9: #{tpu_custom_call.1} parent=1 // pred_fallthru
      _
    // Predicated region
    $region10: #{tpu_custom_call.1} parent=1 // pred_check
      _
    $region11: #{tpu_custom_call.1} parent=1 // pred_check_branch
      %15 = sbr.rel (0) target = $region13
    $region12: #{tpu_custom_call.1} parent=1 // pred_region
      _
    $region13: #{tpu_custom_call.1} parent=1 // pred_fallthru
      _
    // Predicated region
    $region14: #{tpu_custom_call.1} parent=1 // pred_check
      _
    $region15: #{tpu_custom_call.1} parent=1 // pred_check_branch
      %17 = sbr.rel (0) target = $region17
    $region16: #{tpu_custom_call.1} parent=1 // pred_region
      _
    $region17: #{tpu_custom_call.1} parent=1 // pred_fallthru
      _
    %v18 = vld [vmem:[%s2] sm:$0x1]
    %v19 = vmul.f32 %v18, 1.442695
    %v20 = vpow.pop %v19
    %v21 = vld [vmem:[%s0] sm:$0xff]
    %v22 = vld [vmem:[%s0 + $0x8] sm:$0xff]
    %v23 = vld [vmem:[%s0 + $0x10] sm:$0xff]
    %v24 = vld [vmem:[%s0 + $0x18] sm:$0xff]
    %v26 = vlaneseq
    %v27 = vshrl.u32 %v26, 7
    %v28 = vsub.s32 0, %v27
    %v29 = vrot.slane %v20, %v28
    %v31 = vmul.f32 %v21, %v29
    %v32 = vmul.f32 %v22, %v29
    %v33 = vmul.f32 %v23, %v29
    %v34 = vmul.f32 %v24, %v29
    %v35 = vld [vmem:[%s3] sm:$0x1]
    %v37 = vlaneseq
    %v38 = vshrl.u32 %v37, 7
    %v39 = vsub.s32 0, %v38
    %v40 = vrot.slane %v35, %v39
    %v42 = vadd.f32 %v31, %v40
    %v43 = vadd.f32 %v32, %v40
    %v44 = vadd.f32 %v33, %v40
    %v45 = vadd.f32 %v34, %v40
    %v46 = vld [vmem:[%s1] sm:$0xff]
    %v47 = vld [vmem:[%s1 + $0x8] sm:$0xff]
    %v48 = vld [vmem:[%s1 + $0x10] sm:$0xff]
    %v49 = vld [vmem:[%s1 + $0x18] sm:$0xff]
    %51 = vset.pattern.permute.xlu0 0
    %52 = vperm.xlu0 %51, %v46
    %v53 = vpop.permute.xlu0 %52
    %56 = vset.pattern.permute.xlu0 0
    %57 = vperm.xlu0 %56, %v47
    %v58 = vpop.permute.xlu0 %57
    %61 = vset.pattern.permute.xlu0 0
    %62 = vperm.xlu0 %61, %v48
    %v63 = vpop.permute.xlu0 %62
    %66 = vset.pattern.permute.xlu0 0
    %67 = vperm.xlu0 %66, %v49
    %v68 = vpop.permute.xlu0 %67
    %v70 = vmul.f32 %v42, %v53
    %v71 = vmul.f32 %v43, %v58
    %v72 = vmul.f32 %v44, %v63
    %v73 = vmul.f32 %v45, %v68
    %vm74 = vcmask 261120
    %75 = vst.msk [vmem:[#allocation2] sm:$0xff] %vm74, %v70
    %76 = vst.msk [vmem:[#allocation2 + $0x8] sm:$0xff] %vm74, %v71
    %77 = vst.msk [vmem:[#allocation2 + $0x10] sm:$0xff] %vm74, %v72
    %78 = vst.msk [vmem:[#allocation2 + $0x18] sm:$0xff] %vm74, %v73
    // Predicated region
    $region18: #{tpu_custom_call.1} parent=1 // pred_check
      _
    $region19: #{tpu_custom_call.1} parent=1 // pred_check_branch
      %80 = sbr.rel (0) target = $region21
    $region20: #{tpu_custom_call.1} parent=1 // pred_region
      %s82 = ssub.s32 512, 512
      %83 = vsyncadd [#allocation3], %s82
      %s84 = sshll.u32 [#allocation2], 4
      %s85 = int_to_ptr.vmem [resolvable:$true] %s84
      %90 = dma.vmem_to_hbm [thread:$0]  %s85, 512, %s4, [#allocation3], 128, 128, 8
    $region21: #{tpu_custom_call.1} parent=1 // pred_fallthru
      _
    // Predicated region
    $region22: #{tpu_custom_call.1} parent=1 // pred_check
      _
    $region23: #{tpu_custom_call.1} parent=1 // pred_check_branch
      %92 = sbr.rel (0) target = $region25
    $region24: #{tpu_custom_call.1} parent=1 // pred_region
      %93 = dma.done [#allocation3], 512
    $region25: #{tpu_custom_call.1} parent=1 // pred_fallthru
      _
    %94 = vsyncpa [#allocation3], 1

</llo_original>
